<compile_context>
chip_gen: v7x
topology: tpu7x:2x2x1
jax: 0.10.0
libtpu: 0.0.40
codegen_flags: <defaults>
</compile_context>

<pallas_src>
import jax
import jax.numpy as jnp
from jax import lax
from jax.experimental import pallas as pl
from jax.experimental.pallas import tpu as pltpu

# PGD config (matches the PyTorch `config` dict)
EPSILON = 8.0 / 255
NUM_STEPS = 10
STEP_SIZE = 2.0 / 255
NUM_CLASSES = 10


def _make_pgd_kernel(unroll):
    def _pgd_kernel(x0_ref, noise_ref, w_ref, wt_ref, b_ref,
                    tgt_oh_ref, tgt_idx_ref,
                    logits_ref, xadv_ref, kappa_ref):
        TB, D = x0_ref.shape
        C = w_ref.shape[1]

        x0 = x0_ref[...]                       # (TB, D) clean inputs
        w_f32 = w_ref[...]                     # (D, C)  f32 (final forward)
        w_bf = w_f32.astype(jnp.bfloat16)      # single-pass MXU operands
        wt_bf = wt_ref[...].astype(jnp.bfloat16)   # (C, D)
        tgt_oh = tgt_oh_ref[...]               # (TB, C) one-hot targets
        tgt_idx = tgt_idx_ref[...]             # (TB, 1) int32 targets

        # ---- loop-invariant hoists ---------------------------------------
        b_full = jnp.broadcast_to(b_ref[...], (TB, C))
        lo = jnp.maximum(x0 - jnp.float32(EPSILON), 0.0)   # projection bounds
        hi = jnp.minimum(x0 + jnp.float32(EPSILON), 1.0)
        class_ids = lax.broadcasted_iota(jnp.int32, (TB, C), 1)

        # initial perturbation (NOT clipped before the first forward,
        # matching the PyTorch code)
        x_init = x0 + noise_ref[...]
        kappa_init = jnp.zeros((TB, 1), jnp.int32)

        def body(_, carry):
            x, kappa = carry

            # forward: logits = x @ W + b  (bf16 operands, f32 accumulate)
            logits = jnp.dot(x.astype(jnp.bfloat16), w_bf,
                             preferred_element_type=jnp.float32) + b_full

            # predict = argmax over classes (first max index, like torch.max)
            maxv = jnp.max(logits, axis=1, keepdims=True)
            pred = jnp.min(jnp.where(logits == maxv, class_ids, C),
                           axis=1, keepdims=True)                   # (TB, 1)
            kappa = kappa + (pred == tgt_idx).astype(jnp.int32)

            # d(sum-CE)/dlogits = softmax(logits) - onehot(targets)
            ez = jnp.exp(logits - maxv)
            g_logits = ez / jnp.sum(ez, axis=1, keepdims=True) - tgt_oh

            # d loss / d x = g_logits @ W^T   (MXU, bf16 operands)
            grad_x = jnp.dot(g_logits.astype(jnp.bfloat16), wt_bf,
                             preferred_element_type=jnp.float32)

            # step = STEP_SIZE * sign(grad): cmp+select with merged constants
            # (exact sign(0)=0 semantics preserved)
            step = jnp.where(grad_x > 0, jnp.float32(STEP_SIZE),
                             jnp.where(grad_x < 0, jnp.float32(-STEP_SIZE),
                                       jnp.float32(0.0)))

            # PGD step + eps-ball/[0,1] projection (bounds hoisted)
            x = jnp.minimum(jnp.maximum(x + step, lo), hi)
            return x, kappa

        x_fin, kappa_fin = lax.fori_loop(0, NUM_STEPS, body,
                                         (x_init, kappa_init), unroll=unroll)

        # final forward on the adversarial example (kept at f32)
        logits_ref[...] = (jnp.dot(x_fin, w_f32,
                                   preferred_element_type=jnp.float32)
                           + b_full).astype(logits_ref.dtype)
        xadv_ref[...] = x_fin.astype(xadv_ref.dtype)
        kappa_ref[...] = kappa_fin

    return _pgd_kernel


def _vmem_plan():
    """(tile-sizing budget, vmem_limit_bytes, unroll) based on chip VMEM."""
    cap = 64 * 1024 * 1024                     # conservative default (v7x-class)
    try:
        info = pltpu.get_tpu_info()
        cap = int(getattr(info, "vmem_capacity_bytes", cap) or cap)
    except Exception:
        pass
    vmem_limit = int(cap * 0.75)               # v5e/v6e -> 96 MiB, v7x -> 48 MiB
    budget = int(cap * 0.60)                   # tile sizing stays inside the limit
    unroll = cap >= 100 * 1024 * 1024          # unroll only with roomy VMEM
    return budget, vmem_limit, unroll


def _pick_batch_tile(B, D_pad, vmem_budget_bytes):
    """Largest batch tile (multiple of 8, <=512) whose VMEM footprint —
    double-buffered (TB, D) IO streams + in-kernel live temporaries — fits."""
    # 3 (TB, D) f32 IO streams, double-buffered by the pipeline (x0, noise, x_adv)
    # + ~10 live (TB, D) f32 temporaries (x, lo, hi, grad, update, bf16 copies).
    per_row_bytes = (2 * 3 + 10) * D_pad * 4
    max_tb = max(8, (vmem_budget_bytes // per_row_bytes) // 8 * 8)
    tb = min(max_tb, 512)
    if B >= 16:
        # guarantee >= 2 grid tiles so ("parallel",) shards over both v7x TCs
        half = (((B + 1) // 2) + 7) // 8 * 8
        tb = min(tb, half)
    tb = min(tb, ((B + 7) // 8) * 8)           # no bigger than the padded batch
    return max(8, tb)


def attack_pgd(inputs_nchw, targets, w, bias, key=None, seed=0):
    """inputs_nchw: (B, C, H, W) f32 in [0,1]; targets: (B,) int32.

    Returns (basic_net(x_adv) logits, x_adv, Kappa), like AttackPGD.forward."""
    B, Cc, H, Wd = inputs_nchw.shape
    D = Cc * H * Wd
    assert w.shape == (D, NUM_CLASSES)

    # pad feature dim to a multiple of 256 -> lane-dense vregs, full MXU tiles
    D_pad = ((D + 255) // 256) * 256

    budget, vmem_limit, unroll = _vmem_plan()
    TB = _pick_batch_tile(B, D_pad, budget)
    n_tiles = pl.cdiv(B, TB)
    B_pad = n_tiles * TB

    x0 = inputs_nchw.reshape(B, D).astype(jnp.float32)
    targets = targets.astype(jnp.int32)

    # initial uniform(-eps, eps) perturbation, generated host-side
    if key is None:
        key = jax.random.PRNGKey(seed)
    noise = jax.random.uniform(key, (B, D), jnp.float32,
                               minval=-EPSILON, maxval=EPSILON)

    # zero-pad batch rows and feature columns (padded cols have zero weights,
    # zero noise and zero gradient -> they never influence real outputs)
    x0_p = jnp.pad(x0, ((0, B_pad - B), (0, D_pad - D)))
    noise_p = jnp.pad(noise, ((0, B_pad - B), (0, D_pad - D)))
    targets_p = jnp.pad(targets, (0, B_pad - B))

    tgt_oh = jax.nn.one_hot(targets_p, NUM_CLASSES, dtype=jnp.float32)
    tgt_idx = targets_p.reshape(B_pad, 1)
    w_pad = jnp.pad(w.astype(jnp.float32), ((0, D_pad - D), (0, 0)))
    wt_pad = w_pad.T
    b2 = bias.reshape(1, NUM_CLASSES).astype(jnp.float32)

    tile_map = lambda i: (i, 0)     # batch-tiled arrays
    const_map = lambda i: (0, 0)    # weights/bias: VMEM-resident, DMA'd once

    in_specs = [
        pl.BlockSpec((TB, D_pad), tile_map),               # x0
        pl.BlockSpec((TB, D_pad), tile_map),               # noise
        pl.BlockSpec((D_pad, NUM_CLASSES), const_map),     # W
        pl.BlockSpec((NUM_CLASSES, D_pad), const_map),     # W^T
        pl.BlockSpec((1, NUM_CLASSES), const_map),         # bias
        pl.BlockSpec((TB, NUM_CLASSES), tile_map),         # one-hot targets
        pl.BlockSpec((TB, 1), tile_map),                   # target indices
    ]
    out_specs = (
        pl.BlockSpec((TB, NUM_CLASSES), tile_map),         # basic_net(x_adv)
        pl.BlockSpec((TB, D_pad), tile_map),               # x_adv (flat, padded)
        pl.BlockSpec((TB, 1), tile_map),                   # Kappa
    )
    out_shapes = (
        jax.ShapeDtypeStruct((B_pad, NUM_CLASSES), jnp.float32),
        jax.ShapeDtypeStruct((B_pad, D_pad), jnp.float32),
        jax.ShapeDtypeStruct((B_pad, 1), jnp.int32),
    )

    # advisory cost hint: 2 matmuls/step + final forward + elementwise update
    flops = ((2 * NUM_STEPS + 1) * 2 * B_pad * D_pad * NUM_CLASSES
             + NUM_STEPS * 10 * B_pad * D_pad)
    cost = pl.CostEstimate(
        flops=int(flops),
        transcendentals=int(NUM_STEPS * B_pad * NUM_CLASSES),
        bytes_accessed=int((3 * B_pad * D_pad + 2 * D_pad * NUM_CLASSES
                            + B_pad * NUM_CLASSES) * 4),
    )

    logits, xadv_flat, kappa = pl.pallas_call(
        _make_pgd_kernel(unroll),
        out_shape=out_shapes,
        grid=(n_tiles,),
        in_specs=in_specs,
        out_specs=out_specs,
        compiler_params=pltpu.CompilerParams(
            dimension_semantics=("parallel",),   # megacore sharding on v7x
            vmem_limit_bytes=vmem_limit,
        ),
        cost_estimate=cost,
    )(x0_p, noise_p, w_pad, wt_pad, b2, tgt_oh, tgt_idx)

    logits = logits[:B]
    x_adv = xadv_flat[:B, :D].reshape(B, Cc, H, Wd)
    kappa = kappa[:B, 0]
    return logits, x_adv, kappa


if __name__ == "__main__":
    key = jax.random.PRNGKey(0)
    k_x, k_t, k_w, k_b, k_n = jax.random.split(key, 5)

    B, C, H, W = 2, 4, 16, 16
    D = C * H * W

    inputs = jax.random.uniform(k_x, (B, C, H, W), jnp.float32)          # in [0,1]
    targets = jax.random.randint(k_t, (B,), 0, NUM_CLASSES, jnp.int32)

    # deterministic synthetic basic_net parameters (linear classifier)
    w = jax.random.normal(k_w, (D, NUM_CLASSES), jnp.float32) * 0.05
    bias = jax.random.normal(k_b, (NUM_CLASSES,), jnp.float32) * 0.01

    logits, x_adv, kappa = attack_pgd(inputs, targets, w, bias, key=k_n)
    jax.block_until_ready((logits, x_adv, kappa))

    assert logits.shape == (B, NUM_CLASSES)
    assert x_adv.shape == (B, C, H, W)
    assert kappa.shape == (B,)
    # adversarial example must lie in [0,1] and within the eps-ball of inputs
    assert bool(jnp.all(x_adv >= 0.0)) and bool(jnp.all(x_adv <= 1.0))
    assert bool(jnp.all(jnp.abs(x_adv - inputs) <= EPSILON + 1e-6))
    # Kappa counts correct predictions over the 10 PGD steps
    assert bool(jnp.all((kappa >= 0) & (kappa <= NUM_STEPS)))
    # final logits must equal the (f32) linear forward on x_adv
    ref_logits = x_adv.reshape(B, D) @ w + bias
    assert bool(jnp.all(jnp.abs(logits - ref_logits) < 5e-3))

    print("KERNEL_OK")
</pallas_src>

<mosaic_0001>
module attributes {stable_mosaic.version = 11 : i64} {
  func.func @_pgd_kernel(%arg0: i32, %arg1: memref<8x1024xf32, #tpu.memory_space<vmem>>, %arg2: memref<8x1024xf32, #tpu.memory_space<vmem>>, %arg3: memref<1024x10xf32, #tpu.memory_space<vmem>>, %arg4: memref<10x1024xf32, #tpu.memory_space<vmem>>, %arg5: memref<1x10xf32, #tpu.memory_space<vmem>>, %arg6: memref<8x10xf32, #tpu.memory_space<vmem>>, %arg7: memref<8x1xi32, #tpu.memory_space<vmem>>, %arg8: memref<8x10xf32, #tpu.memory_space<vmem>>, %arg9: memref<8x1024xf32, #tpu.memory_space<vmem>>, %arg10: memref<8x1xi32, #tpu.memory_space<vmem>>) attributes {dimension_semantics = [#tpu.dimension_semantics<parallel>], iteration_bounds = array<i64: 1>, scalar_prefetch = 0 : i64, scratch_operands = 0 : i64, tpu.core_type = #tpu.core_type<tc>, window_params = [{transform_indices = @transform_0, window_bounds = array<i64: 8, 1024>}, {transform_indices = @transform_1, window_bounds = array<i64: 8, 1024>}, {pipeline_mode = #tpu.pipeline_mode<synchronous>, transform_indices = @transform_2, window_bounds = array<i64: 1024, 10>}, {pipeline_mode = #tpu.pipeline_mode<synchronous>, transform_indices = @transform_3, window_bounds = array<i64: 10, 1024>}, {pipeline_mode = #tpu.pipeline_mode<synchronous>, transform_indices = @transform_4, window_bounds = array<i64: 1, 10>}, {transform_indices = @transform_5, window_bounds = array<i64: 8, 10>}, {transform_indices = @transform_6, window_bounds = array<i64: 8, 1>}, {transform_indices = @transform_7, window_bounds = array<i64: 8, 10>}, {transform_indices = @transform_8, window_bounds = array<i64: 8, 1024>}, {transform_indices = @transform_9, window_bounds = array<i64: 8, 1>}]} {
    %c0 = arith.constant 0 : index
    %c0_0 = arith.constant 0 : index
    %0 = vector.load %arg1[%c0, %c0_0] : memref<8x1024xf32, #tpu.memory_space<vmem>>, vector<8x1024xf32>
    %c0_1 = arith.constant 0 : index
    %c0_2 = arith.constant 0 : index
    %1 = vector.load %arg3[%c0_1, %c0_2] : memref<1024x10xf32, #tpu.memory_space<vmem>>, vector<1024x10xf32>
    %2 = arith.truncf %1 : vector<1024x10xf32> to vector<1024x10xbf16>
    %c0_3 = arith.constant 0 : index
    %c0_4 = arith.constant 0 : index
    %3 = vector.load %arg4[%c0_3, %c0_4] : memref<10x1024xf32, #tpu.memory_space<vmem>>, vector<10x1024xf32>
    %4 = arith.truncf %3 : vector<10x1024xf32> to vector<10x1024xbf16>
    %c0_5 = arith.constant 0 : index
    %c0_6 = arith.constant 0 : index
    %5 = vector.load %arg6[%c0_5, %c0_6] : memref<8x10xf32, #tpu.memory_space<vmem>>, vector<8x10xf32>
    %c0_7 = arith.constant 0 : index
    %c0_8 = arith.constant 0 : index
    %6 = vector.load %arg7[%c0_7, %c0_8] : memref<8x1xi32, #tpu.memory_space<vmem>>, vector<8x1xi32>
    %c0_9 = arith.constant 0 : index
    %c0_10 = arith.constant 0 : index
    %7 = vector.load %arg5[%c0_9, %c0_10] : memref<1x10xf32, #tpu.memory_space<vmem>>, vector<1x10xf32>
    %8 = vector.shape_cast %7 : vector<1x10xf32> to vector<1x10xf32>
    %9 = vector.broadcast %8 : vector<1x10xf32> to vector<8x10xf32>
    %cst = arith.constant 0.0313725509 : f32
    %10 = vector.broadcast %cst : f32 to vector<8x1024xf32>
    %11 = arith.subf %0, %10 : vector<8x1024xf32>
    %cst_11 = arith.constant 0.000000e+00 : f32
    %12 = vector.broadcast %cst_11 : f32 to vector<8x1024xf32>
    %13 = arith.maximumf %11, %12 : vector<8x1024xf32>
    %cst_12 = arith.constant 0.0313725509 : f32
    %14 = vector.broadcast %cst_12 : f32 to vector<8x1024xf32>
    %15 = arith.addf %0, %14 : vector<8x1024xf32>
    %cst_13 = arith.constant 1.000000e+00 : f32
    %16 = vector.broadcast %cst_13 : f32 to vector<8x1024xf32>
    %17 = arith.minimumf %15, %16 : vector<8x1024xf32>
    %18 = tpu.iota {dimensions = array<i32: 1>} : vector<8x10xi32>
    %c0_14 = arith.constant 0 : index
    %c0_15 = arith.constant 0 : index
    %19 = vector.load %arg2[%c0_14, %c0_15] : memref<8x1024xf32, #tpu.memory_space<vmem>>, vector<8x1024xf32>
    %20 = arith.addf %0, %19 : vector<8x1024xf32>
    %c0_i32 = arith.constant 0 : i32
    %21 = vector.broadcast %c0_i32 : i32 to vector<8x1xi32>
    %c0_i32_16 = arith.constant 0 : i32
    %c10_i32 = arith.constant 10 : i32
    %22 = arith.addi %c0_i32_16, %c10_i32 : i32
    %c1_i32 = arith.constant 1 : i32
    %23:2 = scf.for %arg11 = %c0_i32_16 to %22 step %c1_i32 iter_args(%arg12 = %20, %arg13 = %21) -> (vector<8x1024xf32>, vector<8x1xi32>)  : i32 {
      %29 = arith.truncf %arg12 : vector<8x1024xf32> to vector<8x1024xbf16>
      %cst_24 = arith.constant dense<0.000000e+00> : vector<8x10xf32>
      %30 = tpu.matmul %29, %2, %cst_24 {dimension_numbers = #tpu.dot_dimension_numbers<[1], [0], [0], [1], [0, 0, 1, 1], [], []>} : vector<8x1024xbf16>, vector<1024x10xbf16>, vector<8x10xf32> -> vector<8x10xf32>
      %31 = arith.addf %30, %9 : vector<8x10xf32>
      %cst_25 = arith.constant dense<0xFF800000> : vector<8xf32>
      %32 = vector.multi_reduction <maximumf>, %31, %cst_25 [1] : vector<8x10xf32> to vector<8xf32>
      %33 = vector.shape_cast %32 : vector<8xf32> to vector<8x1xf32>
      %34 = vector.broadcast %33 : vector<8x1xf32> to vector<8x10xf32>
      %35 = arith.cmpf oeq, %31, %34 : vector<8x10xf32>
      %c10_i32_26 = arith.constant 10 : i32
      %36 = vector.broadcast %c10_i32_26 : i32 to vector<8x10xi32>
      %37 = arith.select %35, %18, %36 : vector<8x10xi1>, vector<8x10xi32>
      %cst_27 = arith.constant dense<2147483647> : vector<8xi32>
      %38 = vector.multi_reduction <minsi>, %37, %cst_27 [1] : vector<8x10xi32> to vector<8xi32>
      %39 = vector.shape_cast %38 : vector<8xi32> to vector<8x1xi32>
      %40 = arith.cmpi eq, %39, %6 : vector<8x1xi32>
      %41 = arith.extui %40 : vector<8x1xi1> to vector<8x1xi32>
      %42 = arith.addi %arg13, %41 : vector<8x1xi32>
      %43 = vector.broadcast %33 : vector<8x1xf32> to vector<8x10xf32>
      %44 = arith.subf %31, %43 : vector<8x10xf32>
      %45 = math.exp %44 : vector<8x10xf32>
      %cst_28 = arith.constant dense<0.000000e+00> : vector<8xf32>
      %46 = vector.multi_reduction <add>, %45, %cst_28 [1] : vector<8x10xf32> to vector<8xf32>
      %47 = vector.shape_cast %46 : vector<8xf32> to vector<8x1xf32>
      %48 = vector.broadcast %47 : vector<8x1xf32> to vector<8x10xf32>
      %49 = arith.divf %45, %48 : vector<8x10xf32>
      %50 = arith.subf %49, %5 : vector<8x10xf32>
      %51 = arith.truncf %50 : vector<8x10xf32> to vector<8x10xbf16>
      %cst_29 = arith.constant dense<0.000000e+00> : vector<8x1024xf32>
      %52 = tpu.matmul %51, %4, %cst_29 {dimension_numbers = #tpu.dot_dimension_numbers<[1], [0], [0], [1], [0, 0, 1, 1], [], []>} : vector<8x10xbf16>, vector<10x1024xbf16>, vector<8x1024xf32> -> vector<8x1024xf32>
      %cst_30 = arith.constant 0.000000e+00 : f32
      %53 = vector.broadcast %cst_30 : f32 to vector<8x1024xf32>
      %54 = arith.cmpf ogt, %52, %53 : vector<8x1024xf32>
      %cst_31 = arith.constant 0.000000e+00 : f32
      %55 = vector.broadcast %cst_31 : f32 to vector<8x1024xf32>
      %56 = arith.cmpf olt, %52, %55 : vector<8x1024xf32>
      %cst_32 = arith.constant -0.00784313772 : f32
      %cst_33 = arith.constant 0.000000e+00 : f32
      %57 = vector.broadcast %cst_32 : f32 to vector<8x1024xf32>
      %58 = vector.broadcast %cst_33 : f32 to vector<8x1024xf32>
      %59 = arith.select %56, %57, %58 : vector<8x1024xi1>, vector<8x1024xf32>
      %cst_34 = arith.constant 0.00784313772 : f32
      %60 = vector.broadcast %cst_34 : f32 to vector<8x1024xf32>
      %61 = arith.select %54, %60, %59 : vector<8x1024xi1>, vector<8x1024xf32>
      %62 = arith.addf %arg12, %61 : vector<8x1024xf32>
      %63 = arith.maximumf %62, %13 : vector<8x1024xf32>
      %64 = arith.minimumf %63, %17 : vector<8x1024xf32>
      scf.yield %64, %42 : vector<8x1024xf32>, vector<8x1xi32>
    }
    %cst_17 = arith.constant dense<0.000000e+00> : vector<8x10xf32>
    %24 = tpu.matmul %23#0, %1, %cst_17 {dimension_numbers = #tpu.dot_dimension_numbers<[1], [0], [0], [1], [0, 0, 1, 1], [], []>} : vector<8x1024xf32>, vector<1024x10xf32>, vector<8x10xf32> -> vector<8x10xf32>
    %25 = arith.addf %24, %9 : vector<8x10xf32>
    %c0_18 = arith.constant 0 : index
    %c0_19 = arith.constant 0 : index
    %26 = vector.load %arg8[%c0_18, %c0_19] : memref<8x10xf32, #tpu.memory_space<vmem>>, vector<8x10xf32>
    tpu.vector_store %arg8[%c0_18, %c0_19], %25 {strides = array<i32>} : memref<8x10xf32, #tpu.memory_space<vmem>>, vector<8x10xf32>,
    %c0_20 = arith.constant 0 : index
    %c0_21 = arith.constant 0 : index
    %27 = vector.load %arg9[%c0_20, %c0_21] : memref<8x1024xf32, #tpu.memory_space<vmem>>, vector<8x1024xf32>
    tpu.vector_store %arg9[%c0_20, %c0_21], %23#0 {strides = array<i32>} : memref<8x1024xf32, #tpu.memory_space<vmem>>, vector<8x1024xf32>,
    %c0_22 = arith.constant 0 : index
    %c0_23 = arith.constant 0 : index
    %28 = vector.load %arg10[%c0_22, %c0_23] : memref<8x1xi32, #tpu.memory_space<vmem>>, vector<8x1xi32>
    tpu.vector_store %arg10[%c0_22, %c0_23], %23#1 {strides = array<i32>} : memref<8x1xi32, #tpu.memory_space<vmem>>, vector<8x1xi32>,
    return
  }
  func.func @transform_0(%arg0: i32) -> (i32, i32) {
    %c0_i32 = arith.constant 0 : i32
    %c0_i32_0 = arith.constant 0 : i32
    return %arg0, %c0_i32 : i32, i32
  }
  func.func @transform_1(%arg0: i32) -> (i32, i32) {
    %c0_i32 = arith.constant 0 : i32
    %c0_i32_0 = arith.constant 0 : i32
    return %arg0, %c0_i32 : i32, i32
  }
  func.func @transform_2(%arg0: i32) -> (i32, i32) {
    %c0_i32 = arith.constant 0 : i32
    %c0_i32_0 = arith.constant 0 : i32
    %c0_i32_1 = arith.constant 0 : i32
    return %c0_i32, %c0_i32_0 : i32, i32
  }
  func.func @transform_3(%arg0: i32) -> (i32, i32) {
    %c0_i32 = arith.constant 0 : i32
    %c0_i32_0 = arith.constant 0 : i32
    %c0_i32_1 = arith.constant 0 : i32
    return %c0_i32, %c0_i32_0 : i32, i32
  }
  func.func @transform_4(%arg0: i32) -> (i32, i32) {
    %c0_i32 = arith.constant 0 : i32
    %c0_i32_0 = arith.constant 0 : i32
    %c0_i32_1 = arith.constant 0 : i32
    return %c0_i32, %c0_i32_0 : i32, i32
  }
  func.func @transform_5(%arg0: i32) -> (i32, i32) {
    %c0_i32 = arith.constant 0 : i32
    %c0_i32_0 = arith.constant 0 : i32
    return %arg0, %c0_i32 : i32, i32
  }
  func.func @transform_6(%arg0: i32) -> (i32, i32) {
    %c0_i32 = arith.constant 0 : i32
    %c0_i32_0 = arith.constant 0 : i32
    return %arg0, %c0_i32 : i32, i32
  }
  func.func @transform_7(%arg0: i32) -> (i32, i32) {
    %c0_i32 = arith.constant 0 : i32
    %c0_i32_0 = arith.constant 0 : i32
    return %arg0, %c0_i32 : i32, i32
  }
  func.func @transform_8(%arg0: i32) -> (i32, i32) {
    %c0_i32 = arith.constant 0 : i32
    %c0_i32_0 = arith.constant 0 : i32
    return %arg0, %c0_i32 : i32, i32
  }
  func.func @transform_9(%arg0: i32) -> (i32, i32) {
    %c0_i32 = arith.constant 0 : i32
    %c0_i32_0 = arith.constant 0 : i32
    return %arg0, %c0_i32 : i32, i32
  }
}

</mosaic_0001>

<llo_original>
// kernel: tpu_custom_call.1
$region0: #{tpu_custom_call.1}
  #allocation0 [shape = 'u32[]', space=smem, size = 0x4, offset = 0x4, fixed_abs, tag = 'smem constant byte address 0x4 - core index']
  #allocation1 [shape = 'u32[144,128]{1,0:T(1,128)}', space=vmem, size = 0x12000, scoped, tag = 'internal scratch']
  %s0 = inlined_call_operand.vmem [shape: f32[8,1024], index: 0, kind: input, shape index: {}]
  %s1 = inlined_call_operand.vmem [shape: f32[8,1024], index: 1, kind: input, shape index: {}]
  %s2 = inlined_call_operand.vmem [shape: f32[1024,10], index: 2, kind: input, shape index: {}]
  %s3 = inlined_call_operand.vmem [shape: f32[10,1024], index: 3, kind: input, shape index: {}]
  %s4 = inlined_call_operand.vmem [shape: f32[1,10], index: 4, kind: input, shape index: {}]
  %s5 = inlined_call_operand.vmem [shape: f32[8,10], index: 5, kind: input, shape index: {}]
  %s6 = inlined_call_operand.vmem [shape: s32[8,1], index: 6, kind: input, shape index: {}]
  %s7 = inlined_call_operand.hbm [shape: f32[8,10], index: 7, kind: output, shape index: {0}]
  %s8 = inlined_call_operand.hbm [shape: f32[8,1024], index: 8, kind: output, shape index: {1}]
  %s9 = inlined_call_operand.vmem [shape: s32[8,1], index: 9, kind: output, shape index: {2}]
  %10 = xla_tuple %s7, %s8, %s9
  %s11 = sld [smem:[#allocation0]]
  $region61: #{tpu_custom_call.1} parent=0
    _
  %s13 = ssub.s32 1, %s11
  %s14 = scalar_select 0, %s13, %s11
  $region1: #{tpu_custom_call.1} parent=0
    #allocation2 [shape = 'u8[4096]{0}', space=vmem, size = 0x1000, scoped, tag = 'output window, operand 0, single buffered']
    #allocation3 [shape = 's32[1]{0}', space=sflag, size = 0x4, scoped, tag = 'scoped memory for tpu_custom_call.1']
    #allocation4 [shape = 'u8[32768]{0}', space=vmem, size = 0x8000, scoped, tag = 'output window, operand 1, single buffered']
    #allocation5 [shape = 's32[1]{0}', space=sflag, size = 0x4, scoped, tag = 'scoped memory for tpu_custom_call.1']
    %15 = vsyncpa [#allocation3], 0
    %16 = vsyncpa [#allocation5], 0
    // Predicated region
    $region2: #{tpu_custom_call.1} parent=1 // pred_check
      _
    $region3: #{tpu_custom_call.1} parent=1 // pred_check_branch
      %18 = sbr.rel (0) target = $region5
    $region4: #{tpu_custom_call.1} parent=1 // pred_region
      _
    $region5: #{tpu_custom_call.1} parent=1 // pred_fallthru
      _
    // Predicated region
    $region6: #{tpu_custom_call.1} parent=1 // pred_check
      _
    $region7: #{tpu_custom_call.1} parent=1 // pred_check_branch
      %20 = sbr.rel (0) target = $region9
    $region8: #{tpu_custom_call.1} parent=1 // pred_region
      _
    $region9: #{tpu_custom_call.1} parent=1 // pred_fallthru
      _
    // Predicated region
    $region10: #{tpu_custom_call.1} parent=1 // pred_check
      _
    $region11: #{tpu_custom_call.1} parent=1 // pred_check_branch
      %22 = sbr.rel (0) target = $region13
    $region12: #{tpu_custom_call.1} parent=1 // pred_region
      _
    $region13: #{tpu_custom_call.1} parent=1 // pred_fallthru
      _
    // Predicated region
    $region14: #{tpu_custom_call.1} parent=1 // pred_check
      _
    $region15: #{tpu_custom_call.1} parent=1 // pred_check_branch
      %24 = sbr.rel (0) target = $region17
    $region16: #{tpu_custom_call.1} parent=1 // pred_region
      _
    $region17: #{tpu_custom_call.1} parent=1 // pred_fallthru
      _
    // Predicated region
    $region18: #{tpu_custom_call.1} parent=1 // pred_check
      _
    $region19: #{tpu_custom_call.1} parent=1 // pred_check_branch
      %26 = sbr.rel (0) target = $region21
    $region20: #{tpu_custom_call.1} parent=1 // pred_region
      _
    $region21: #{tpu_custom_call.1} parent=1 // pred_fallthru
      _
    // Predicated region
    $region22: #{tpu_custom_call.1} parent=1 // pred_check
      _
    $region23: #{tpu_custom_call.1} parent=1 // pred_check_branch
      %28 = sbr.rel (0) target = $region25
    $region24: #{tpu_custom_call.1} parent=1 // pred_region
      _
    $region25: #{tpu_custom_call.1} parent=1 // pred_fallthru
      _
    // Predicated region
    $region26: #{tpu_custom_call.1} parent=1 // pred_check
      _
    $region27: #{tpu_custom_call.1} parent=1 // pred_check_branch
      %30 = sbr.rel (0) target = $region29
    $region28: #{tpu_custom_call.1} parent=1 // pred_region
      _
    $region29: #{tpu_custom_call.1} parent=1 // pred_fallthru
      _
    %v32 = vld [vmem:[%s0] sm:$0xff]
    %v33 = vld [vmem:[%s0 + $0x8] sm:$0xff]
    %v34 = vld [vmem:[%s0 + $0x10] sm:$0xff]
    %v35 = vld [vmem:[%s0 + $0x18] sm:$0xff]
    %v36 = vld [vmem:[%s0 + $0x20] sm:$0xff]
    %v37 = vld [vmem:[%s0 + $0x28] sm:$0xff]
    %v38 = vld [vmem:[%s0 + $0x30] sm:$0xff]
    %v39 = vld [vmem:[%s0 + $0x38] sm:$0xff]
    %v40 = vld [vmem:[%s2] sm:$0xff]
    %v41 = vld [vmem:[%s2 + $0x8] sm:$0xff]
    %v42 = vld [vmem:[%s2 + $0x10] sm:$0xff]
    %v43 = vld [vmem:[%s2 + $0x18] sm:$0xff]
    %v44 = vld [vmem:[%s2 + $0x20] sm:$0xff]
    %v45 = vld [vmem:[%s2 + $0x28] sm:$0xff]
    %v46 = vld [vmem:[%s2 + $0x30] sm:$0xff]
    %v47 = vld [vmem:[%s2 + $0x38] sm:$0xff]
    %v48 = vld [vmem:[%s2 + $0x40] sm:$0xff]
    %v49 = vld [vmem:[%s2 + $0x48] sm:$0xff]
    %v50 = vld [vmem:[%s2 + $0x50] sm:$0xff]
    %v51 = vld [vmem:[%s2 + $0x58] sm:$0xff]
    %v52 = vld [vmem:[%s2 + $0x60] sm:$0xff]
    %v53 = vld [vmem:[%s2 + $0x68] sm:$0xff]
    %v54 = vld [vmem:[%s2 + $0x70] sm:$0xff]
    %v55 = vld [vmem:[%s2 + $0x78] sm:$0xff]
    %v56 = vld [vmem:[%s2 + $0x80] sm:$0xff]
    %v57 = vld [vmem:[%s2 + $0x88] sm:$0xff]
    %v58 = vld [vmem:[%s2 + $0x90] sm:$0xff]
    %v59 = vld [vmem:[%s2 + $0x98] sm:$0xff]
    %v60 = vld [vmem:[%s2 + $0xa0] sm:$0xff]
    %v61 = vld [vmem:[%s2 + $0xa8] sm:$0xff]
    %v62 = vld [vmem:[%s2 + $0xb0] sm:$0xff]
    %v63 = vld [vmem:[%s2 + $0xb8] sm:$0xff]
    %v64 = vld [vmem:[%s2 + $0xc0] sm:$0xff]
    %v65 = vld [vmem:[%s2 + $0xc8] sm:$0xff]
    %v66 = vld [vmem:[%s2 + $0xd0] sm:$0xff]
    %v67 = vld [vmem:[%s2 + $0xd8] sm:$0xff]
    %v68 = vld [vmem:[%s2 + $0xe0] sm:$0xff]
    %v69 = vld [vmem:[%s2 + $0xe8] sm:$0xff]
    %v70 = vld [vmem:[%s2 + $0xf0] sm:$0xff]
    %v71 = vld [vmem:[%s2 + $0xf8] sm:$0xff]
    %v72 = vld [vmem:[%s2 + $0x100] sm:$0xff]
    %v73 = vld [vmem:[%s2 + $0x108] sm:$0xff]
    %v74 = vld [vmem:[%s2 + $0x110] sm:$0xff]
    %v75 = vld [vmem:[%s2 + $0x118] sm:$0xff]
    %v76 = vld [vmem:[%s2 + $0x120] sm:$0xff]
    %v77 = vld [vmem:[%s2 + $0x128] sm:$0xff]
    %v78 = vld [vmem:[%s2 + $0x130] sm:$0xff]
    %v79 = vld [vmem:[%s2 + $0x138] sm:$0xff]
    %v80 = vld [vmem:[%s2 + $0x140] sm:$0xff]
    %v81 = vld [vmem:[%s2 + $0x148] sm:$0xff]
    %v82 = vld [vmem:[%s2 + $0x150] sm:$0xff]
    %v83 = vld [vmem:[%s2 + $0x158] sm:$0xff]
    %v84 = vld [vmem:[%s2 + $0x160] sm:$0xff]
    %v85 = vld [vmem:[%s2 + $0x168] sm:$0xff]
    %v86 = vld [vmem:[%s2 + $0x170] sm:$0xff]
    %v87 = vld [vmem:[%s2 + $0x178] sm:$0xff]
    %v88 = vld [vmem:[%s2 + $0x180] sm:$0xff]
    %v89 = vld [vmem:[%s2 + $0x188] sm:$0xff]
    %v90 = vld [vmem:[%s2 + $0x190] sm:$0xff]
    %v91 = vld [vmem:[%s2 + $0x198] sm:$0xff]
    %v92 = vld [vmem:[%s2 + $0x1a0] sm:$0xff]
    %v93 = vld [vmem:[%s2 + $0x1a8] sm:$0xff]
    %v94 = vld [vmem:[%s2 + $0x1b0] sm:$0xff]
    %v95 = vld [vmem:[%s2 + $0x1b8] sm:$0xff]
    %v96 = vld [vmem:[%s2 + $0x1c0] sm:$0xff]
    %v97 = vld [vmem:[%s2 + $0x1c8] sm:$0xff]
    %v98 = vld [vmem:[%s2 + $0x1d0] sm:$0xff]
    %v99 = vld [vmem:[%s2 + $0x1d8] sm:$0xff]
    %v100 = vld [vmem:[%s2 + $0x1e0] sm:$0xff]
    %v101 = vld [vmem:[%s2 + $0x1e8] sm:$0xff]
    %v102 = vld [vmem:[%s2 + $0x1f0] sm:$0xff]
    %v103 = vld [vmem:[%s2 + $0x1f8] sm:$0xff]
    %v104 = vld [vmem:[%s2 + $0x200] sm:$0xff]
    %v105 = vld [vmem:[%s2 + $0x208] sm:$0xff]
    %v106 = vld [vmem:[%s2 + $0x210] sm:$0xff]
    %v107 = vld [vmem:[%s2 + $0x218] sm:$0xff]
    %v108 = vld [vmem:[%s2 + $0x220] sm:$0xff]
    %v109 = vld [vmem:[%s2 + $0x228] sm:$0xff]
    %v110 = vld [vmem:[%s2 + $0x230] sm:$0xff]
    %v111 = vld [vmem:[%s2 + $0x238] sm:$0xff]
    %v112 = vld [vmem:[%s2 + $0x240] sm:$0xff]
    %v113 = vld [vmem:[%s2 + $0x248] sm:$0xff]
    %v114 = vld [vmem:[%s2 + $0x250] sm:$0xff]
    %v115 = vld [vmem:[%s2 + $0x258] sm:$0xff]
    %v116 = vld [vmem:[%s2 + $0x260] sm:$0xff]
    %v117 = vld [vmem:[%s2 + $0x268] sm:$0xff]
    %v118 = vld [vmem:[%s2 + $0x270] sm:$0xff]
    %v119 = vld [vmem:[%s2 + $0x278] sm:$0xff]
    %v120 = vld [vmem:[%s2 + $0x280] sm:$0xff]
    %v121 = vld [vmem:[%s2 + $0x288] sm:$0xff]
    %v122 = vld [vmem:[%s2 + $0x290] sm:$0xff]
    %v123 = vld [vmem:[%s2 + $0x298] sm:$0xff]
    %v124 = vld [vmem:[%s2 + $0x2a0] sm:$0xff]
    %v125 = vld [vmem:[%s2 + $0x2a8] sm:$0xff]
    %v126 = vld [vmem:[%s2 + $0x2b0] sm:$0xff]
    %v127 = vld [vmem:[%s2 + $0x2b8] sm:$0xff]
    %v128 = vld [vmem:[%s2 + $0x2c0] sm:$0xff]
    %v129 = vld [vmem:[%s2 + $0x2c8] sm:$0xff]
    %v130 = vld [vmem:[%s2 + $0x2d0] sm:$0xff]
    %v131 = vld [vmem:[%s2 + $0x2d8] sm:$0xff]
    %v132 = vld [vmem:[%s2 + $0x2e0] sm:$0xff]
    %v133 = vld [vmem:[%s2 + $0x2e8] sm:$0xff]
    %v134 = vld [vmem:[%s2 + $0x2f0] sm:$0xff]
    %v135 = vld [vmem:[%s2 + $0x2f8] sm:$0xff]
    %v136 = vld [vmem:[%s2 + $0x300] sm:$0xff]
    %v137 = vld [vmem:[%s2 + $0x308] sm:$0xff]
    %v138 = vld [vmem:[%s2 + $0x310] sm:$0xff]
    %v139 = vld [vmem:[%s2 + $0x318] sm:$0xff]
    %v140 = vld [vmem:[%s2 + $0x320] sm:$0xff]
    %v141 = vld [vmem:[%s2 + $0x328] sm:$0xff]
    %v142 = vld [vmem:[%s2 + $0x330] sm:$0xff]
    %v143 = vld [vmem:[%s2 + $0x338] sm:$0xff]
    %v144 = vld [vmem:[%s2 + $0x340] sm:$0xff]
    %v145 = vld [vmem:[%s2 + $0x348] sm:$0xff]
    %v146 = vld [vmem:[%s2 + $0x350] sm:$0xff]
    %v147 = vld [vmem:[%s2 + $0x358] sm:$0xff]
    %v148 = vld [vmem:[%s2 + $0x360] sm:$0xff]
    %v149 = vld [vmem:[%s2 + $0x368] sm:$0xff]
    %v150 = vld [vmem:[%s2 + $0x370] sm:$0xff]
    %v151 = vld [vmem:[%s2 + $0x378] sm:$0xff]
    %v152 = vld [vmem:[%s2 + $0x380] sm:$0xff]
    %v153 = vld [vmem:[%s2 + $0x388] sm:$0xff]
    %v154 = vld [vmem:[%s2 + $0x390] sm:$0xff]
    %v155 = vld [vmem:[%s2 + $0x398] sm:$0xff]
    %v156 = vld [vmem:[%s2 + $0x3a0] sm:$0xff]
    %v157 = vld [vmem:[%s2 + $0x3a8] sm:$0xff]
    %v158 = vld [vmem:[%s2 + $0x3b0] sm:$0xff]
    %v159 = vld [vmem:[%s2 + $0x3b8] sm:$0xff]
    %v160 = vld [vmem:[%s2 + $0x3c0] sm:$0xff]
    %v161 = vld [vmem:[%s2 + $0x3c8] sm:$0xff]
    %v162 = vld [vmem:[%s2 + $0x3d0] sm:$0xff]
    %v163 = vld [vmem:[%s2 + $0x3d8] sm:$0xff]
    %v164 = vld [vmem:[%s2 + $0x3e0] sm:$0xff]
    %v165 = vld [vmem:[%s2 + $0x3e8] sm:$0xff]
    %v166 = vld [vmem:[%s2 + $0x3f0] sm:$0xff]
    %v167 = vld [vmem:[%s2 + $0x3f8] sm:$0xff]
    %v168 = vpack.c.bf16 %v41, %v40
    %v169 = vpack.c.bf16 %v43, %v42
    %v170 = vpack.c.bf16 %v45, %v44
    %v171 = vpack.c.bf16 %v47, %v46
    %v172 = vpack.c.bf16 %v49, %v48
    %v173 = vpack.c.bf16 %v51, %v50
    %v174 = vpack.c.bf16 %v53, %v52
    %v175 = vpack.c.bf16 %v55, %v54
    %v176 = vpack.c.bf16 %v57, %v56
    %v177 = vpack.c.bf16 %v59, %v58
    %v178 = vpack.c.bf16 %v61, %v60
    %v179 = vpack.c.bf16 %v63, %v62
    %v180 = vpack.c.bf16 %v65, %v64
    %v181 = vpack.c.bf16 %v67, %v66
    %v182 = vpack.c.bf16 %v69, %v68
    %v183 = vpack.c.bf16 %v71, %v70
    %v184 = vpack.c.bf16 %v73, %v72
    %v185 = vpack.c.bf16 %v75, %v74
    %v186 = vpack.c.bf16 %v77, %v76
    %v187 = vpack.c.bf16 %v79, %v78
    %v188 = vpack.c.bf16 %v81, %v80
    %v189 = vpack.c.bf16 %v83, %v82
    %v190 = vpack.c.bf16 %v85, %v84
    %v191 = vpack.c.bf16 %v87, %v86
    %v192 = vpack.c.bf16 %v89, %v88
    %v193 = vpack.c.bf16 %v91, %v90
    %v194 = vpack.c.bf16 %v93, %v92
    %v195 = vpack.c.bf16 %v95, %v94
    %v196 = vpack.c.bf16 %v97, %v96
    %v197 = vpack.c.bf16 %v99, %v98
    %v198 = vpack.c.bf16 %v101, %v100
    %v199 = vpack.c.bf16 %v103, %v102
    %v200 = vpack.c.bf16 %v105, %v104
    %v201 = vpack.c.bf16 %v107, %v106
    %v202 = vpack.c.bf16 %v109, %v108
    %v203 = vpack.c.bf16 %v111, %v110
    %v204 = vpack.c.bf16 %v113, %v112
    %v205 = vpack.c.bf16 %v115, %v114
    %v206 = vpack.c.bf16 %v117, %v116
    %v207 = vpack.c.bf16 %v119, %v118
    %v208 = vpack.c.bf16 %v121, %v120
    %v209 = vpack.c.bf16 %v123, %v122
    %v210 = vpack.c.bf16 %v125, %v124
    %v211 = vpack.c.bf16 %v127, %v126
    %v212 = vpack.c.bf16 %v129, %v128
    %v213 = vpack.c.bf16 %v131, %v130
    %v214 = vpack.c.bf16 %v133, %v132
    %v215 = vpack.c.bf16 %v135, %v134
    %v216 = vpack.c.bf16 %v137, %v136
    %v217 = vpack.c.bf16 %v139, %v138
    %v218 = vpack.c.bf16 %v141, %v140
    %v219 = vpack.c.bf16 %v143, %v142
    %v220 = vpack.c.bf16 %v145, %v144
    %v221 = vpack.c.bf16 %v147, %v146
    %v222 = vpack.c.bf16 %v149, %v148
    %v223 = vpack.c.bf16 %v151, %v150
    %v224 = vpack.c.bf16 %v153, %v152
    %v225 = vpack.c.bf16 %v155, %v154
    %v226 = vpack.c.bf16 %v157, %v156
    %v227 = vpack.c.bf16 %v159, %v158
    %v228 = vpack.c.bf16 %v161, %v160
    %v229 = vpack.c.bf16 %v163, %v162
    %v230 = vpack.c.bf16 %v165, %v164
    %v231 = vpack.c.bf16 %v167, %v166
    %v232 = vld [vmem:[%s3] sm:$0xff]
    %v233 = vld [vmem:[%s3 + $0x8] sm:$0xff]
    %v234 = vld [vmem:[%s3 + $0x10] sm:$0xff]
    %v235 = vld [vmem:[%s3 + $0x18] sm:$0xff]
    %v236 = vld [vmem:[%s3 + $0x20] sm:$0xff]
    %v237 = vld [vmem:[%s3 + $0x28] sm:$0xff]
    %v238 = vld [vmem:[%s3 + $0x30] sm:$0xff]
    %v239 = vld [vmem:[%s3 + $0x38] sm:$0xff]
    %v240 = vld [vmem:[%s3 + $0x40] sm:$0x3]
    %v241 = vld [vmem:[%s3 + $0x48] sm:$0x3]
    %v242 = vld [vmem:[%s3 + $0x50] sm:$0x3]
    %v243 = vld [vmem:[%s3 + $0x58] sm:$0x3]
    %v244 = vld [vmem:[%s3 + $0x60] sm:$0x3]
    %v245 = vld [vmem:[%s3 + $0x68] sm:$0x3]
    %v246 = vld [vmem:[%s3 + $0x70] sm:$0x3]
    %v247 = vld [vmem:[%s3 + $0x78] sm:$0x3]
    %v248 = vpack.c.bf16 %v240, %v232
    %v249 = vpack.c.bf16 %v241, %v233
    %v250 = vpack.c.bf16 %v242, %v234
    %v251 = vpack.c.bf16 %v243, %v235
    %v252 = vpack.c.bf16 %v244, %v236
    %v253 = vpack.c.bf16 %v245, %v237
    %v254 = vpack.c.bf16 %v246, %v238
    %v255 = vpack.c.bf16 %v247, %v239
    %v256 = vld [vmem:[%s5] sm:$0xff]
    %v257 = vld [vmem:[%s6] sm:$0xff]
    %v258 = vld [vmem:[%s4] sm:$0x1]
    %v260 = vlaneseq
    %v261 = vshrl.u32 %v260, 7
    %v262 = vsub.s32 0, %v261
    %v263 = vrot.slane %v258, %v262
    %v265 = vsub.f32 %v32, 0.03137255
    %v266 = vsub.f32 %v33, 0.03137255
    %v267 = vsub.f32 %v34, 0.03137255
    %v268 = vsub.f32 %v35, 0.03137255
    %v269 = vsub.f32 %v36, 0.03137255
    %v270 = vsub.f32 %v37, 0.03137255
    %v271 = vsub.f32 %v38, 0.03137255
    %v272 = vsub.f32 %v39, 0.03137255
    %v273 = vmax.f32 %v265, 0.0
    %v274 = vmax.f32 %v266, 0.0
    %v275 = vmax.f32 %v267, 0.0
    %v276 = vmax.f32 %v268, 0.0
    %v277 = vmax.f32 %v269, 0.0
    %v278 = vmax.f32 %v270, 0.0
    %v279 = vmax.f32 %v271, 0.0
    %v280 = vmax.f32 %v272, 0.0
    %v281 = vadd.f32 %v32, 0.03137255
    %v282 = vadd.f32 %v33, 0.03137255
    %v283 = vadd.f32 %v34, 0.03137255
    %v284 = vadd.f32 %v35, 0.03137255
    %v285 = vadd.f32 %v36, 0.03137255
    %v286 = vadd.f32 %v37, 0.03137255
    %v287 = vadd.f32 %v38, 0.03137255
    %v288 = vadd.f32 %v39, 0.03137255
    %v289 = vmin.f32 %v281, 1.0
    %v290 = vmin.f32 %v282, 1.0
    %v291 = vmin.f32 %v283, 1.0
    %v292 = vmin.f32 %v284, 1.0
    %v293 = vmin.f32 %v285, 1.0
    %v294 = vmin.f32 %v286, 1.0
    %v295 = vmin.f32 %v287, 1.0
    %v296 = vmin.f32 %v288, 1.0
    %v297 = vlaneseq
    %v298 = vand.u32 %v297, 127
    %v299 = vld [vmem:[%s1] sm:$0xff]
    %v300 = vld [vmem:[%s1 + $0x8] sm:$0xff]
    %v301 = vld [vmem:[%s1 + $0x10] sm:$0xff]
    %v302 = vld [vmem:[%s1 + $0x18] sm:$0xff]
    %v303 = vld [vmem:[%s1 + $0x20] sm:$0xff]
    %v304 = vld [vmem:[%s1 + $0x28] sm:$0xff]
    %v305 = vld [vmem:[%s1 + $0x30] sm:$0xff]
    %v306 = vld [vmem:[%s1 + $0x38] sm:$0xff]
    %v307 = vadd.f32 %v32, %v299
    %v308 = vadd.f32 %v33, %v300
    %v309 = vadd.f32 %v34, %v301
    %v310 = vadd.f32 %v35, %v302
    %v311 = vadd.f32 %v36, %v303
    %v312 = vadd.f32 %v37, %v304
    %v313 = vadd.f32 %v38, %v305
    %v314 = vadd.f32 %v39, %v306
    loop: start=0, step=1, limit=10
    $region30: #{tpu_custom_call.1} parent=1 // loop_pre_header
      _
    $region31: #{tpu_custom_call.1} parent=1 // loop_header
      %s316 = sphi 0, %s320
      %p317 = scmp.ge.s32.totalorder %s316, 10
      %v321 = vphi %v307, %v772
      %v322 = vphi %v308, %v773
      %v323 = vphi %v309, %v774
      %v324 = vphi %v310, %v775
      %v325 = vphi %v311, %v776
      %v326 = vphi %v312, %v777
      %v327 = vphi %v313, %v778
      %v328 = vphi %v314, %v779
      %v329 = vphi 0, %v521
    $region32: #{tpu_custom_call.1} parent=1 // loop_header_branch
      %319 = sbr.rel (%p317) target = $region36
    $region33: #{tpu_custom_call.1} parent=1 // loop_body
      %v330 = vpack.c.bf16 %v321, %v321
      %v331 = vpack.c.bf16 %v322, %v322
      %v332 = vpack.c.bf16 %v323, %v323
      %v333 = vpack.c.bf16 %v324, %v324
      %v334 = vpack.c.bf16 %v325, %v325
      %v335 = vpack.c.bf16 %v326, %v326
      %v336 = vpack.c.bf16 %v327, %v327
      %v337 = vpack.c.bf16 %v328, %v328
      %338 = vmatprep.subr.bf16.mxu0 0
      %339 = vmatpush1.bf16.msra.mxu0 %v168
      %340 = vmatprep.subr.bf16.mxu0 0
      %341 = vmatpush1.bf16.msra.mxu0 %v169
      %342 = vmatprep.subr.bf16.mxu0 0
      %343 = vmatpush1.bf16.msra.mxu0 %v170
      %344 = vmatprep.subr.bf16.mxu0 0
      %345 = vmatpush1.bf16.msra.mxu0 %v171
      %346 = vmatprep.subr.bf16.mxu0 0
      %347 = vmatpush1.bf16.msra.mxu0 %v172
      %348 = vmatprep.subr.bf16.mxu0 0
      %349 = vmatpush1.bf16.msra.mxu0 %v173
      %350 = vmatprep.subr.bf16.mxu0 0
      %351 = vmatpush1.bf16.msra.mxu0 %v174
      %352 = vmatprep.subr.bf16.mxu0 0
      %353 = vmatpush1.bf16.msra.mxu0 %v175
      %354 = vmatprep.subr.bf16.mxu0 0
      %355 = vmatpush1.bf16.msra.mxu0 %v176
      %356 = vmatprep.subr.bf16.mxu0 0
      %357 = vmatpush1.bf16.msra.mxu0 %v177
      %358 = vmatprep.subr.bf16.mxu0 0
      %359 = vmatpush1.bf16.msra.mxu0 %v178
      %360 = vmatprep.subr.bf16.mxu0 0
      %361 = vmatpush1.bf16.msra.mxu0 %v179
      %362 = vmatprep.subr.bf16.mxu0 0
      %363 = vmatpush1.bf16.msra.mxu0 %v180
      %364 = vmatprep.subr.bf16.mxu0 0
      %365 = vmatpush1.bf16.msra.mxu0 %v181
      %366 = vmatprep.subr.bf16.mxu0 0
      %367 = vmatpush1.bf16.msra.mxu0 %v182
      %368 = vmatprep.subr.bf16.mxu0 0
      %369 = vmatpush1.bf16.msra.mxu0 %v183
      %370 = vmatprep.mubr.bf16.mxu0 %v331
      %371 = vmatmul.mubr.bf16.gmra.mrb[0].mxu0 %v330
      %v372 = vpop.f32.mrb[0].mxu0
      %v373 = vadd.f32 %v263, %v372
      %v374 = vpop.f32.mrb[0].mxu0
      %v375 = vpop.f32.mrb[0].mxu0
      %v376 = vpop.f32.mrb[0].mxu0
      %377 = vdwg.mxu0
      %378 = vmatprep.subr.bf16.mxu0 0
      %379 = vmatpush1.bf16.msra.mxu0 %v184
      %380 = vmatprep.subr.bf16.mxu0 0
      %381 = vmatpush1.bf16.msra.mxu0 %v185
      %382 = vmatprep.subr.bf16.mxu0 0
      %383 = vmatpush1.bf16.msra.mxu0 %v186
      %384 = vmatprep.subr.bf16.mxu0 0
      %385 = vmatpush1.bf16.msra.mxu0 %v187
      %386 = vmatprep.subr.bf16.mxu0 0
      %387 = vmatpush1.bf16.msra.mxu0 %v188
      %388 = vmatprep.subr.bf16.mxu0 0
      %389 = vmatpush1.bf16.msra.mxu0 %v189
      %390 = vmatprep.subr.bf16.mxu0 0
      %391 = vmatpush1.bf16.msra.mxu0 %v190
      %392 = vmatprep.subr.bf16.mxu0 0
      %393 = vmatpush1.bf16.msra.mxu0 %v191
      %394 = vmatprep.subr.bf16.mxu0 0
      %395 = vmatpush1.bf16.msra.mxu0 %v192
      %396 = vmatprep.subr.bf16.mxu0 0
      %397 = vmatpush1.bf16.msra.mxu0 %v193
      %398 = vmatprep.subr.bf16.mxu0 0
      %399 = vmatpush1.bf16.msra.mxu0 %v194
      %400 = vmatprep.subr.bf16.mxu0 0
      %401 = vmatpush1.bf16.msra.mxu0 %v195
      %402 = vmatprep.subr.bf16.mxu0 0
      %403 = vmatpush1.bf16.msra.mxu0 %v196
      %404 = vmatprep.subr.bf16.mxu0 0
      %405 = vmatpush1.bf16.msra.mxu0 %v197
      %406 = vmatprep.subr.bf16.mxu0 0
      %407 = vmatpush1.bf16.msra.mxu0 %v198
      %408 = vmatprep.subr.bf16.mxu0 0
      %409 = vmatpush1.bf16.msra.mxu0 %v199
      %410 = vmatprep.mubr.bf16.mxu0 %v333
      %411 = vmatmul.mubr.bf16.gmra.mrb[0].mxu0 %v332
      %v412 = vpop.f32.mrb[0].mxu0
      %v413 = vadd.f32 %v373, %v412
      %v414 = vpop.f32.mrb[0].mxu0
      %v415 = vpop.f32.mrb[0].mxu0
      %v416 = vpop.f32.mrb[0].mxu0
      %417 = vdwg.mxu0
      %418 = vmatprep.subr.bf16.mxu0 0
      %419 = vmatpush1.bf16.msra.mxu0 %v200
      %420 = vmatprep.subr.bf16.mxu0 0
      %421 = vmatpush1.bf16.msra.mxu0 %v201
      %422 = vmatprep.subr.bf16.mxu0 0
      %423 = vmatpush1.bf16.msra.mxu0 %v202
      %424 = vmatprep.subr.bf16.mxu0 0
      %425 = vmatpush1.bf16.msra.mxu0 %v203
      %426 = vmatprep.subr.bf16.mxu0 0
      %427 = vmatpush1.bf16.msra.mxu0 %v204
      %428 = vmatprep.subr.bf16.mxu0 0
      %429 = vmatpush1.bf16.msra.mxu0 %v205
      %430 = vmatprep.subr.bf16.mxu0 0
      %431 = vmatpush1.bf16.msra.mxu0 %v206
      %432 = vmatprep.subr.bf16.mxu0 0
      %433 = vmatpush1.bf16.msra.mxu0 %v207
      %434 = vmatprep.subr.bf16.mxu0 0
      %435 = vmatpush1.bf16.msra.mxu0 %v208
      %436 = vmatprep.subr.bf16.mxu0 0
      %437 = vmatpush1.bf16.msra.mxu0 %v209
      %438 = vmatprep.subr.bf16.mxu0 0
      %439 = vmatpush1.bf16.msra.mxu0 %v210
      %440 = vmatprep.subr.bf16.mxu0 0
      %441 = vmatpush1.bf16.msra.mxu0 %v211
      %442 = vmatprep.subr.bf16.mxu0 0
      %443 = vmatpush1.bf16.msra.mxu0 %v212
      %444 = vmatprep.subr.bf16.mxu0 0
      %445 = vmatpush1.bf16.msra.mxu0 %v213
      %446 = vmatprep.subr.bf16.mxu0 0
      %447 = vmatpush1.bf16.msra.mxu0 %v214
      %448 = vmatprep.subr.bf16.mxu0 0
      %449 = vmatpush1.bf16.msra.mxu0 %v215
      %450 = vmatprep.mubr.bf16.mxu0 %v335
      %451 = vmatmul.mubr.bf16.gmra.mrb[0].mxu0 %v334
      %v452 = vpop.f32.mrb[0].mxu0
      %v453 = vadd.f32 %v413, %v452
      %v454 = vpop.f32.mrb[0].mxu0
      %v455 = vpop.f32.mrb[0].mxu0
      %v456 = vpop.f32.mrb[0].mxu0
      %457 = vdwg.mxu0
      %458 = vmatprep.subr.bf16.mxu0 0
      %459 = vmatpush1.bf16.msra.mxu0 %v216
      %460 = vmatprep.subr.bf16.mxu0 0
      %461 = vmatpush1.bf16.msra.mxu0 %v217
      %462 = vmatprep.subr.bf16.mxu0 0
      %463 = vmatpush1.bf16.msra.mxu0 %v218
      %464 = vmatprep.subr.bf16.mxu0 0
      %465 = vmatpush1.bf16.msra.mxu0 %v219
      %466 = vmatprep.subr.bf16.mxu0 0
      %467 = vmatpush1.bf16.msra.mxu0 %v220
      %468 = vmatprep.subr.bf16.mxu0 0
      %469 = vmatpush1.bf16.msra.mxu0 %v221
      %470 = vmatprep.subr.bf16.mxu0 0
      %471 = vmatpush1.bf16.msra.mxu0 %v222
      %472 = vmatprep.subr.bf16.mxu0 0
      %473 = vmatpush1.bf16.msra.mxu0 %v223
      %474 = vmatprep.subr.bf16.mxu0 0
      %475 = vmatpush1.bf16.msra.mxu0 %v224
      %476 = vmatprep.subr.bf16.mxu0 0
      %477 = vmatpush1.bf16.msra.mxu0 %v225
      %478 = vmatprep.subr.bf16.mxu0 0
      %479 = vmatpush1.bf16.msra.mxu0 %v226
      %480 = vmatprep.subr.bf16.mxu0 0
      %481 = vmatpush1.bf16.msra.mxu0 %v227
      %482 = vmatprep.subr.bf16.mxu0 0
      %483 = vmatpush1.bf16.msra.mxu0 %v228
      %484 = vmatprep.subr.bf16.mxu0 0
      %485 = vmatpush1.bf16.msra.mxu0 %v229
      %486 = vmatprep.subr.bf16.mxu0 0
      %487 = vmatpush1.bf16.msra.mxu0 %v230
      %488 = vmatprep.subr.bf16.mxu0 0
      %489 = vmatpush1.bf16.msra.mxu0 %v231
      %490 = vmatprep.mubr.bf16.mxu0 %v337
      %491 = vmatmul.mubr.bf16.gmra.mrb[0].mxu0 %v336
      %v492 = vpop.f32.mrb[0].mxu0
      %v493 = vadd.f32 %v453, %v492
      %v494 = vpop.f32.mrb[0].mxu0
      %v495 = vpop.f32.mrb[0].mxu0
      %v496 = vpop.f32.mrb[0].mxu0
      %497 = vdwg.mxu0
      %vm498 = vcmask 80896
      %v499 = vsel %vm498, %v493, -inf
      %500 = vmax.xlane.f32.xlu0 %v499
      %v501 = vpop.xlane.xlu0 %500
      %vm502 = vcmp.eq.f32.partialorder %v493, %v501
      %v503 = vsel %vm502, %v298, 10
      %v504 = vsel %vm498, %v503, 2147483647
      %v505 = vand.u32 %v504, 65535
      %v506 = vshra.s32 %v504, 16
      %v507 = vcvt.s32.f32 %v505
      %v508 = vcvt.s32.f32 %v506
      %509 = vmin.xlane.f32.xlu0 %v508
      %v510 = vpop.xlane.xlu0 %509
      %vm511 = vcmp.eq.f32.partialorder %v508, %v510
      %v512 = vsel %vm511, %v507, inf
      %513 = vmin.xlane.f32.xlu0 %v512
      %v514 = vpop.xlane.xlu0 %513
      %v515 = vcvt.f32.s32 %v514
      %v516 = vcvt.f32.s32 %v510
      %v517 = vshll.u32 %v516, 16
      %v518 = vadd.s32 %v517, %v515
      %vm519 = vcmp.eq.s32.totalorder %v518, %v257
      %v520 = vsel %vm519, 1, 0
      %v521 = vadd.s32 %v329, %v520
      %v522 = vsub.f32 %v493, %v501
      %v523 = vmul.f32 %v522, 1.442695
      %v524 = vpow.pop %v523
      %v525 = vsel %vm498, %v524, 0.0
      %526 = vadd.xlane.f32.xlu0 %v525
      %v527 = vpop.xlane.xlu0 %526
      %v528 = vrcp.pop %v527
      %v529 = vmul.f32 %v524, %v528
      %v530 = vsub.f32 %v529, %v256
      %v531 = vpack.c.bf16 %v530, %v530
      %v533 = vsel %vm498, %v531, 0
      %vm535 = vcmask 1044480
      %v537 = vsel %vm535, %v248, 0
      %v540 = vsel %vm535, %v249, 0
      %v543 = vsel %vm535, %v250, 0
      %v546 = vsel %vm535, %v251, 0
      %v549 = vsel %vm535, %v252, 0
      %v552 = vsel %vm535, %v253, 0
      %v555 = vsel %vm535, %v254, 0
      %v558 = vsel %vm535, %v255, 0
      %560 = vmatprep.subr.bf16.mxu0 %v540
      %561 = vmatpush1.bf16.msra.mxu0 %v537
      %562 = vmatprep.subr.bf16.mxu0 0
      %563 = vmatpush1.bf16.msra.mxu0 0
      %564 = vmatprep.subr.bf16.mxu0 0
      %565 = vmatpush1.bf16.msra.mxu0 0
      %566 = vmatprep.subr.bf16.mxu0 0
      %567 = vmatpush1.bf16.msra.mxu0 0
      %568 = vmatprep.subr.bf16.mxu0 0
      %569 = vmatpush1.bf16.msra.mxu0 0
      %570 = vmatprep.subr.bf16.mxu0 0
      %571 = vmatpush1.bf16.msra.mxu0 0
      %572 = vmatprep.subr.bf16.mxu0 0
      %573 = vmatpush1.bf16.msra.mxu0 0
      %574 = vmatprep.subr.bf16.mxu0 0
      %575 = vmatpush1.bf16.msra.mxu0 0
      %576 = vmatprep.subr.bf16.mxu0 0
      %577 = vmatpush1.bf16.msra.mxu0 0
      %578 = vmatprep.subr.bf16.mxu0 0
      %579 = vmatpush1.bf16.msra.mxu0 0
      %580 = vmatprep.subr.bf16.mxu0 0
      %581 = vmatpush1.bf16.msra.mxu0 0
      %582 = vmatprep.subr.bf16.mxu0 0
      %583 = vmatpush1.bf16.msra.mxu0 0
      %584 = vmatprep.subr.bf16.mxu0 0
      %585 = vmatpush1.bf16.msra.mxu0 0
      %586 = vmatprep.subr.bf16.mxu0 0
      %587 = vmatpush1.bf16.msra.mxu0 0
      %588 = vmatprep.subr.bf16.mxu0 0
      %589 = vmatpush1.bf16.msra.mxu0 0
      %590 = vmatprep.subr.bf16.mxu0 0
      %591 = vmatpush1.bf16.msra.mxu0 0
      %592 = vmatprep.mubr.bf16.mxu0 0
      %593 = vmatmul.mubr.bf16.gmra.mrb[0].mxu0 %v533
      %v594 = vpop.f32.mrb[0].mxu0
      %v595 = vadd.f32 0.0, %v594
      %v596 = vpop.f32.mrb[0].mxu0
      %v597 = vadd.f32 0.0, %v596
      %v598 = vpop.f32.mrb[0].mxu0
      %v599 = vpop.f32.mrb[0].mxu0
      %600 = vdwg.mxu0
      %601 = vmatprep.subr.bf16.mxu0 %v546
      %602 = vmatpush1.bf16.msra.mxu0 %v543
      %603 = vmatprep.subr.bf16.mxu0 0
      %604 = vmatpush1.bf16.msra.mxu0 0
      %605 = vmatprep.subr.bf16.mxu0 0
      %606 = vmatpush1.bf16.msra.mxu0 0
      %607 = vmatprep.subr.bf16.mxu0 0
      %608 = vmatpush1.bf16.msra.mxu0 0
      %609 = vmatprep.subr.bf16.mxu0 0
      %610 = vmatpush1.bf16.msra.mxu0 0
      %611 = vmatprep.subr.bf16.mxu0 0
      %612 = vmatpush1.bf16.msra.mxu0 0
      %613 = vmatprep.subr.bf16.mxu0 0
      %614 = vmatpush1.bf16.msra.mxu0 0
      %615 = vmatprep.subr.bf16.mxu0 0
      %616 = vmatpush1.bf16.msra.mxu0 0
      %617 = vmatprep.subr.bf16.mxu0 0
      %618 = vmatpush1.bf16.msra.mxu0 0
      %619 = vmatprep.subr.bf16.mxu0 0
      %620 = vmatpush1.bf16.msra.mxu0 0
      %621 = vmatprep.subr.bf16.mxu0 0
      %622 = vmatpush1.bf16.msra.mxu0 0
      %623 = vmatprep.subr.bf16.mxu0 0
      %624 = vmatpush1.bf16.msra.mxu0 0
      %625 = vmatprep.subr.bf16.mxu0 0
      %626 = vmatpush1.bf16.msra.mxu0 0
      %627 = vmatprep.subr.bf16.mxu0 0
      %628 = vmatpush1.bf16.msra.mxu0 0
      %629 = vmatprep.subr.bf16.mxu0 0
      %630 = vmatpush1.bf16.msra.mxu0 0
      %631 = vmatprep.subr.bf16.mxu0 0
      %632 = vmatpush1.bf16.msra.mxu0 0
      %633 = vmatprep.mubr.bf16.mxu0 0
      %634 = vmatmul.mubr.bf16.gmra.mrb[0].mxu0 %v533
      %v635 = vpop.f32.mrb[0].mxu0
      %v636 = vadd.f32 0.0, %v635
      %v637 = vpop.f32.mrb[0].mxu0
      %v638 = vadd.f32 0.0, %v637
      %v639 = vpop.f32.mrb[0].mxu0
      %v640 = vpop.f32.mrb[0].mxu0
      %641 = vdwg.mxu0
      %642 = vmatprep.subr.bf16.mxu0 %v552
      %643 = vmatpush1.bf16.msra.mxu0 %v549
      %644 = vmatprep.subr.bf16.mxu0 0
      %645 = vmatpush1.bf16.msra.mxu0 0
      %646 = vmatprep.subr.bf16.mxu0 0
      %647 = vmatpush1.bf16.msra.mxu0 0
      %648 = vmatprep.subr.bf16.mxu0 0
      %649 = vmatpush1.bf16.msra.mxu0 0
      %650 = vmatprep.subr.bf16.mxu0 0
      %651 = vmatpush1.bf16.msra.mxu0 0
      %652 = vmatprep.subr.bf16.mxu0 0
      %653 = vmatpush1.bf16.msra.mxu0 0
      %654 = vmatprep.subr.bf16.mxu0 0
      %655 = vmatpush1.bf16.msra.mxu0 0
      %656 = vmatprep.subr.bf16.mxu0 0
      %657 = vmatpush1.bf16.msra.mxu0 0
      %658 = vmatprep.subr.bf16.mxu0 0
      %659 = vmatpush1.bf16.msra.mxu0 0
      %660 = vmatprep.subr.bf16.mxu0 0
      %661 = vmatpush1.bf16.msra.mxu0 0
      %662 = vmatprep.subr.bf16.mxu0 0
      %663 = vmatpush1.bf16.msra.mxu0 0
      %664 = vmatprep.subr.bf16.mxu0 0
      %665 = vmatpush1.bf16.msra.mxu0 0
      %666 = vmatprep.subr.bf16.mxu0 0
      %667 = vmatpush1.bf16.msra.mxu0 0
      %668 = vmatprep.subr.bf16.mxu0 0
      %669 = vmatpush1.bf16.msra.mxu0 0
      %670 = vmatprep.subr.bf16.mxu0 0
      %671 = vmatpush1.bf16.msra.mxu0 0
      %672 = vmatprep.subr.bf16.mxu0 0
      %673 = vmatpush1.bf16.msra.mxu0 0
      %674 = vmatprep.mubr.bf16.mxu0 0
      %675 = vmatmul.mubr.bf16.gmra.mrb[0].mxu0 %v533
      %v676 = vpop.f32.mrb[0].mxu0
      %v677 = vadd.f32 0.0, %v676
      %v678 = vpop.f32.mrb[0].mxu0
      %v679 = vadd.f32 0.0, %v678
      %v680 = vpop.f32.mrb[0].mxu0
      %v681 = vpop.f32.mrb[0].mxu0
      %682 = vdwg.mxu0
      %683 = vmatprep.subr.bf16.mxu0 %v558
      %684 = vmatpush1.bf16.msra.mxu0 %v555
      %685 = vmatprep.subr.bf16.mxu0 0
      %686 = vmatpush1.bf16.msra.mxu0 0
      %687 = vmatprep.subr.bf16.mxu0 0
      %688 = vmatpush1.bf16.msra.mxu0 0
      %689 = vmatprep.subr.bf16.mxu0 0
      %690 = vmatpush1.bf16.msra.mxu0 0
      %691 = vmatprep.subr.bf16.mxu0 0
      %692 = vmatpush1.bf16.msra.mxu0 0
      %693 = vmatprep.subr.bf16.mxu0 0
      %694 = vmatpush1.bf16.msra.mxu0 0
      %695 = vmatprep.subr.bf16.mxu0 0
      %696 = vmatpush1.bf16.msra.mxu0 0
      %697 = vmatprep.subr.bf16.mxu0 0
      %698 = vmatpush1.bf16.msra.mxu0 0
      %699 = vmatprep.subr.bf16.mxu0 0
      %700 = vmatpush1.bf16.msra.mxu0 0
      %701 = vmatprep.subr.bf16.mxu0 0
      %702 = vmatpush1.bf16.msra.mxu0 0
      %703 = vmatprep.subr.bf16.mxu0 0
      %704 = vmatpush1.bf16.msra.mxu0 0
      %705 = vmatprep.subr.bf16.mxu0 0
      %706 = vmatpush1.bf16.msra.mxu0 0
      %707 = vmatprep.subr.bf16.mxu0 0
      %708 = vmatpush1.bf16.msra.mxu0 0
      %709 = vmatprep.subr.bf16.mxu0 0
      %710 = vmatpush1.bf16.msra.mxu0 0
      %711 = vmatprep.subr.bf16.mxu0 0
      %712 = vmatpush1.bf16.msra.mxu0 0
      %713 = vmatprep.subr.bf16.mxu0 0
      %714 = vmatpush1.bf16.msra.mxu0 0
      %715 = vmatprep.mubr.bf16.mxu0 0
      %716 = vmatmul.mubr.bf16.gmra.mrb[0].mxu0 %v533
      %v717 = vpop.f32.mrb[0].mxu0
      %v718 = vadd.f32 0.0, %v717
      %v719 = vpop.f32.mrb[0].mxu0
      %v720 = vadd.f32 0.0, %v719
      %v721 = vpop.f32.mrb[0].mxu0
      %v722 = vpop.f32.mrb[0].mxu0
      %723 = vdwg.mxu0
      %vm724 = vcmp.gt.f32.partialorder %v595, 0.0
      %vm725 = vcmp.gt.f32.partialorder %v597, 0.0
      %vm726 = vcmp.gt.f32.partialorder %v636, 0.0
      %vm727 = vcmp.gt.f32.partialorder %v638, 0.0
      %vm728 = vcmp.gt.f32.partialorder %v677, 0.0
      %vm729 = vcmp.gt.f32.partialorder %v679, 0.0
      %vm730 = vcmp.gt.f32.partialorder %v718, 0.0
      %vm731 = vcmp.gt.f32.partialorder %v720, 0.0
      %vm732 = vcmp.lt.f32.partialorder %v595, 0.0
      %vm733 = vcmp.lt.f32.partialorder %v597, 0.0
      %vm734 = vcmp.lt.f32.partialorder %v636, 0.0
      %vm735 = vcmp.lt.f32.partialorder %v638, 0.0
      %vm736 = vcmp.lt.f32.partialorder %v677, 0.0
      %vm737 = vcmp.lt.f32.partialorder %v679, 0.0
      %vm738 = vcmp.lt.f32.partialorder %v718, 0.0
      %vm739 = vcmp.lt.f32.partialorder %v720, 0.0
      %v740 = vsel %vm732, -0.007843138, 0.0
      %v741 = vsel %vm733, -0.007843138, 0.0
      %v742 = vsel %vm734, -0.007843138, 0.0
      %v743 = vsel %vm735, -0.007843138, 0.0
      %v744 = vsel %vm736, -0.007843138, 0.0
      %v745 = vsel %vm737, -0.007843138, 0.0
      %v746 = vsel %vm738, -0.007843138, 0.0
      %v747 = vsel %vm739, -0.007843138, 0.0
      %v748 = vsel %vm724, 0.007843138, %v740
      %v749 = vsel %vm725, 0.007843138, %v741
      %v750 = vsel %vm726, 0.007843138, %v742
      %v751 = vsel %vm727, 0.007843138, %v743
      %v752 = vsel %vm728, 0.007843138, %v744
      %v753 = vsel %vm729, 0.007843138, %v745
      %v754 = vsel %vm730, 0.007843138, %v746
      %v755 = vsel %vm731, 0.007843138, %v747
      %v756 = vadd.f32 %v321, %v748
      %v757 = vadd.f32 %v322, %v749
      %v758 = vadd.f32 %v323, %v750
      %v759 = vadd.f32 %v324, %v751
      %v760 = vadd.f32 %v325, %v752
      %v761 = vadd.f32 %v326, %v753
      %v762 = vadd.f32 %v327, %v754
      %v763 = vadd.f32 %v328, %v755
      %v764 = vmax.f32 %v756, %v273
      %v765 = vmax.f32 %v757, %v274
      %v766 = vmax.f32 %v758, %v275
      %v767 = vmax.f32 %v759, %v276
      %v768 = vmax.f32 %v760, %v277
      %v769 = vmax.f32 %v761, %v278
      %v770 = vmax.f32 %v762, %v279
      %v771 = vmax.f32 %v763, %v280
      %v772 = vmin.f32 %v764, %v289
      %v773 = vmin.f32 %v765, %v290
      %v774 = vmin.f32 %v766, %v291
      %v775 = vmin.f32 %v767, %v292
      %v776 = vmin.f32 %v768, %v293
      %v777 = vmin.f32 %v769, %v294
      %v778 = vmin.f32 %v770, %v295
      %v779 = vmin.f32 %v771, %v296
    $region34: #{tpu_custom_call.1} parent=1 // loop_footer
      %s320 = sadd.s32 1, %s316
    $region35: #{tpu_custom_call.1} parent=1 // loop_footer_branch
      %315 = sbr.rel target = $region31
    $region36: #{tpu_custom_call.1} parent=1 // loop_exit
      _
    %780 = vmatprep.subr.mxu0 0.0
    %781 = vmatpush1.msra.mxu0 %v40
    %782 = vmatprep.subr.mxu0 0.0
    %783 = vmatpush1.msra.mxu0 %v41
    %784 = vmatprep.subr.mxu0 0.0
    %785 = vmatpush1.msra.mxu0 %v42
    %786 = vmatprep.subr.mxu0 0.0
    %787 = vmatpush1.msra.mxu0 %v43
    %788 = vmatprep.subr.mxu0 0.0
    %789 = vmatpush1.msra.mxu0 %v44
    %790 = vmatprep.subr.mxu0 0.0
    %791 = vmatpush1.msra.mxu0 %v45
    %792 = vmatprep.subr.mxu0 0.0
    %793 = vmatpush1.msra.mxu0 %v46
    %794 = vmatprep.subr.mxu0 0.0
    %795 = vmatpush1.msra.mxu0 %v47
    %796 = vmatprep.subr.mxu0 0.0
    %797 = vmatpush1.msra.mxu0 %v48
    %798 = vmatprep.subr.mxu0 0.0
    %799 = vmatpush1.msra.mxu0 %v49
    %800 = vmatprep.subr.mxu0 0.0
    %801 = vmatpush1.msra.mxu0 %v50
    %802 = vmatprep.subr.mxu0 0.0
    %803 = vmatpush1.msra.mxu0 %v51
    %804 = vmatprep.subr.mxu0 0.0
    %805 = vmatpush1.msra.mxu0 %v52
    %806 = vmatprep.subr.mxu0 0.0
    %807 = vmatpush1.msra.mxu0 %v53
    %808 = vmatprep.subr.mxu0 0.0
    %809 = vmatpush1.msra.mxu0 %v54
    %810 = vmatprep.subr.mxu0 0.0
    %811 = vmatpush1.msra.mxu0 %v55
    %812 = vmatprep.subr.mxu0 0.0
    %813 = vmatpush1.msra.mxu0 %v56
    %814 = vmatprep.subr.mxu0 0.0
    %815 = vmatpush1.msra.mxu0 %v57
    %816 = vmatprep.subr.mxu0 0.0
    %817 = vmatpush1.msra.mxu0 %v58
    %818 = vmatprep.subr.mxu0 0.0
    %819 = vmatpush1.msra.mxu0 %v59
    %820 = vmatprep.subr.mxu0 0.0
    %821 = vmatpush1.msra.mxu0 %v60
    %822 = vmatprep.subr.mxu0 0.0
    %823 = vmatpush1.msra.mxu0 %v61
    %824 = vmatprep.subr.mxu0 0.0
    %825 = vmatpush1.msra.mxu0 %v62
    %826 = vmatprep.subr.mxu0 0.0
    %827 = vmatpush1.msra.mxu0 %v63
    %828 = vmatprep.subr.mxu0 0.0
    %829 = vmatpush1.msra.mxu0 %v64
    %830 = vmatprep.subr.mxu0 0.0
    %831 = vmatpush1.msra.mxu0 %v65
    %832 = vmatprep.subr.mxu0 0.0
    %833 = vmatpush1.msra.mxu0 %v66
    %834 = vmatprep.subr.mxu0 0.0
    %835 = vmatpush1.msra.mxu0 %v67
    %836 = vmatprep.subr.mxu0 0.0
    %837 = vmatpush1.msra.mxu0 %v68
    %838 = vmatprep.subr.mxu0 0.0
    %839 = vmatpush1.msra.mxu0 %v69
    %840 = vmatprep.subr.mxu0 0.0
    %841 = vmatpush1.msra.mxu0 %v70
    %842 = vmatprep.subr.mxu0 0.0
    %843 = vmatpush1.msra.mxu0 %v71
    %844 = vmatprep.mubr.f32.mxu0 %v322
    %845 = vmatmul.mubr.f32.gmra.mrb[0].mxu0 %v321
    %v846 = vpop.f32.mrb[0].mxu0
    %v847 = vadd.f32 %v263, %v846
    %v848 = vpop.f32.mrb[0].mxu0
    %849 = vdwg.mxu0
    %850 = vmatprep.subr.mxu0 0.0
    %851 = vmatpush1.msra.mxu0 %v72
    %852 = vmatprep.subr.mxu0 0.0
    %853 = vmatpush1.msra.mxu0 %v73
    %854 = vmatprep.subr.mxu0 0.0
    %855 = vmatpush1.msra.mxu0 %v74
    %856 = vmatprep.subr.mxu0 0.0
    %857 = vmatpush1.msra.mxu0 %v75
    %858 = vmatprep.subr.mxu0 0.0
    %859 = vmatpush1.msra.mxu0 %v76
    %860 = vmatprep.subr.mxu0 0.0
    %861 = vmatpush1.msra.mxu0 %v77
    %862 = vmatprep.subr.mxu0 0.0
    %863 = vmatpush1.msra.mxu0 %v78
    %864 = vmatprep.subr.mxu0 0.0
    %865 = vmatpush1.msra.mxu0 %v79
    %866 = vmatprep.subr.mxu0 0.0
    %867 = vmatpush1.msra.mxu0 %v80
    %868 = vmatprep.subr.mxu0 0.0
    %869 = vmatpush1.msra.mxu0 %v81
    %870 = vmatprep.subr.mxu0 0.0
    %871 = vmatpush1.msra.mxu0 %v82
    %872 = vmatprep.subr.mxu0 0.0
    %873 = vmatpush1.msra.mxu0 %v83
    %874 = vmatprep.subr.mxu0 0.0
    %875 = vmatpush1.msra.mxu0 %v84
    %876 = vmatprep.subr.mxu0 0.0
    %877 = vmatpush1.msra.mxu0 %v85
    %878 = vmatprep.subr.mxu0 0.0
    %879 = vmatpush1.msra.mxu0 %v86
    %880 = vmatprep.subr.mxu0 0.0
    %881 = vmatpush1.msra.mxu0 %v87
    %882 = vmatprep.subr.mxu0 0.0
    %883 = vmatpush1.msra.mxu0 %v88
    %884 = vmatprep.subr.mxu0 0.0
    %885 = vmatpush1.msra.mxu0 %v89
    %886 = vmatprep.subr.mxu0 0.0
    %887 = vmatpush1.msra.mxu0 %v90
    %888 = vmatprep.subr.mxu0 0.0
    %889 = vmatpush1.msra.mxu0 %v91
    %890 = vmatprep.subr.mxu0 0.0
    %891 = vmatpush1.msra.mxu0 %v92
    %892 = vmatprep.subr.mxu0 0.0
    %893 = vmatpush1.msra.mxu0 %v93
    %894 = vmatprep.subr.mxu0 0.0
    %895 = vmatpush1.msra.mxu0 %v94
    %896 = vmatprep.subr.mxu0 0.0
    %897 = vmatpush1.msra.mxu0 %v95
    %898 = vmatprep.subr.mxu0 0.0
    %899 = vmatpush1.msra.mxu0 %v96
    %900 = vmatprep.subr.mxu0 0.0
    %901 = vmatpush1.msra.mxu0 %v97
    %902 = vmatprep.subr.mxu0 0.0
    %903 = vmatpush1.msra.mxu0 %v98
    %904 = vmatprep.subr.mxu0 0.0
    %905 = vmatpush1.msra.mxu0 %v99
    %906 = vmatprep.subr.mxu0 0.0
    %907 = vmatpush1.msra.mxu0 %v100
    %908 = vmatprep.subr.mxu0 0.0
    %909 = vmatpush1.msra.mxu0 %v101
    %910 = vmatprep.subr.mxu0 0.0
    %911 = vmatpush1.msra.mxu0 %v102
    %912 = vmatprep.subr.mxu0 0.0
    %913 = vmatpush1.msra.mxu0 %v103
    %914 = vmatprep.mubr.f32.mxu0 %v324
    %915 = vmatmul.mubr.f32.gmra.mrb[0].mxu0 %v323
    %v916 = vpop.f32.mrb[0].mxu0
    %v917 = vadd.f32 %v847, %v916
    %v918 = vpop.f32.mrb[0].mxu0
    %919 = vdwg.mxu0
    %920 = vmatprep.subr.mxu0 0.0
    %921 = vmatpush1.msra.mxu0 %v104
    %922 = vmatprep.subr.mxu0 0.0
    %923 = vmatpush1.msra.mxu0 %v105
    %924 = vmatprep.subr.mxu0 0.0
    %925 = vmatpush1.msra.mxu0 %v106
    %926 = vmatprep.subr.mxu0 0.0
    %927 = vmatpush1.msra.mxu0 %v107
    %928 = vmatprep.subr.mxu0 0.0
    %929 = vmatpush1.msra.mxu0 %v108
    %930 = vmatprep.subr.mxu0 0.0
    %931 = vmatpush1.msra.mxu0 %v109
    %932 = vmatprep.subr.mxu0 0.0
    %933 = vmatpush1.msra.mxu0 %v110
    %934 = vmatprep.subr.mxu0 0.0
    %935 = vmatpush1.msra.mxu0 %v111
    %936 = vmatprep.subr.mxu0 0.0
    %937 = vmatpush1.msra.mxu0 %v112
    %938 = vmatprep.subr.mxu0 0.0
    %939 = vmatpush1.msra.mxu0 %v113
    %940 = vmatprep.subr.mxu0 0.0
    %941 = vmatpush1.msra.mxu0 %v114
    %942 = vmatprep.subr.mxu0 0.0
    %943 = vmatpush1.msra.mxu0 %v115
    %944 = vmatprep.subr.mxu0 0.0
    %945 = vmatpush1.msra.mxu0 %v116
    %946 = vmatprep.subr.mxu0 0.0
    %947 = vmatpush1.msra.mxu0 %v117
    %948 = vmatprep.subr.mxu0 0.0
    %949 = vmatpush1.msra.mxu0 %v118
    %950 = vmatprep.subr.mxu0 0.0
    %951 = vmatpush1.msra.mxu0 %v119
    %952 = vmatprep.subr.mxu0 0.0
    %953 = vmatpush1.msra.mxu0 %v120
    %954 = vmatprep.subr.mxu0 0.0
    %955 = vmatpush1.msra.mxu0 %v121
    %956 = vmatprep.subr.mxu0 0.0
    %957 = vmatpush1.msra.mxu0 %v122
    %958 = vmatprep.subr.mxu0 0.0
    %959 = vmatpush1.msra.mxu0 %v123
    %960 = vmatprep.subr.mxu0 0.0
    %961 = vmatpush1.msra.mxu0 %v124
    %962 = vmatprep.subr.mxu0 0.0
    %963 = vmatpush1.msra.mxu0 %v125
    %964 = vmatprep.subr.mxu0 0.0
    %965 = vmatpush1.msra.mxu0 %v126
    %966 = vmatprep.subr.mxu0 0.0
    %967 = vmatpush1.msra.mxu0 %v127
    %968 = vmatprep.subr.mxu0 0.0
    %969 = vmatpush1.msra.mxu0 %v128
    %970 = vmatprep.subr.mxu0 0.0
    %971 = vmatpush1.msra.mxu0 %v129
    %972 = vmatprep.subr.mxu0 0.0
    %973 = vmatpush1.msra.mxu0 %v130
    %974 = vmatprep.subr.mxu0 0.0
    %975 = vmatpush1.msra.mxu0 %v131
    %976 = vmatprep.subr.mxu0 0.0
    %977 = vmatpush1.msra.mxu0 %v132
    %978 = vmatprep.subr.mxu0 0.0
    %979 = vmatpush1.msra.mxu0 %v133
    %980 = vmatprep.subr.mxu0 0.0
    %981 = vmatpush1.msra.mxu0 %v134
    %982 = vmatprep.subr.mxu0 0.0
    %983 = vmatpush1.msra.mxu0 %v135
    %984 = vmatprep.mubr.f32.mxu0 %v326
    %985 = vmatmul.mubr.f32.gmra.mrb[0].mxu0 %v325
    %v986 = vpop.f32.mrb[0].mxu0
    %v987 = vadd.f32 %v917, %v986
    %v988 = vpop.f32.mrb[0].mxu0
    %989 = vdwg.mxu0
    %990 = vmatprep.subr.mxu0 0.0
    %991 = vmatpush1.msra.mxu0 %v136
    %992 = vmatprep.subr.mxu0 0.0
    %993 = vmatpush1.msra.mxu0 %v137
    %994 = vmatprep.subr.mxu0 0.0
    %995 = vmatpush1.msra.mxu0 %v138
    %996 = vmatprep.subr.mxu0 0.0
    %997 = vmatpush1.msra.mxu0 %v139
    %998 = vmatprep.subr.mxu0 0.0
    %999 = vmatpush1.msra.mxu0 %v140
    %1000 = vmatprep.subr.mxu0 0.0
    %1001 = vmatpush1.msra.mxu0 %v141
    %1002 = vmatprep.subr.mxu0 0.0
    %1003 = vmatpush1.msra.mxu0 %v142
    %1004 = vmatprep.subr.mxu0 0.0
    %1005 = vmatpush1.msra.mxu0 %v143
    %1006 = vmatprep.subr.mxu0 0.0
    %1007 = vmatpush1.msra.mxu0 %v144
    %1008 = vmatprep.subr.mxu0 0.0
    %1009 = vmatpush1.msra.mxu0 %v145
    %1010 = vmatprep.subr.mxu0 0.0
    %1011 = vmatpush1.msra.mxu0 %v146
    %1012 = vmatprep.subr.mxu0 0.0
    %1013 = vmatpush1.msra.mxu0 %v147
    %1014 = vmatprep.subr.mxu0 0.0
    %1015 = vmatpush1.msra.mxu0 %v148
    %1016 = vmatprep.subr.mxu0 0.0
    %1017 = vmatpush1.msra.mxu0 %v149
    %1018 = vmatprep.subr.mxu0 0.0
    %1019 = vmatpush1.msra.mxu0 %v150
    %1020 = vmatprep.subr.mxu0 0.0
    %1021 = vmatpush1.msra.mxu0 %v151
    %1022 = vmatprep.subr.mxu0 0.0
    %1023 = vmatpush1.msra.mxu0 %v152
    %1024 = vmatprep.subr.mxu0 0.0
    %1025 = vmatpush1.msra.mxu0 %v153
    %1026 = vmatprep.subr.mxu0 0.0
    %1027 = vmatpush1.msra.mxu0 %v154
    %1028 = vmatprep.subr.mxu0 0.0
    %1029 = vmatpush1.msra.mxu0 %v155
    %1030 = vmatprep.subr.mxu0 0.0
    %1031 = vmatpush1.msra.mxu0 %v156
    %1032 = vmatprep.subr.mxu0 0.0
    %1033 = vmatpush1.msra.mxu0 %v157
    %1034 = vmatprep.subr.mxu0 0.0
    %1035 = vmatpush1.msra.mxu0 %v158
    %1036 = vmatprep.subr.mxu0 0.0
    %1037 = vmatpush1.msra.mxu0 %v159
    %1038 = vmatprep.subr.mxu0 0.0
    %1039 = vmatpush1.msra.mxu0 %v160
    %1040 = vmatprep.subr.mxu0 0.0
    %1041 = vmatpush1.msra.mxu0 %v161
    %1042 = vmatprep.subr.mxu0 0.0
    %1043 = vmatpush1.msra.mxu0 %v162
    %1044 = vmatprep.subr.mxu0 0.0
    %1045 = vmatpush1.msra.mxu0 %v163
    %1046 = vmatprep.subr.mxu0 0.0
    %1047 = vmatpush1.msra.mxu0 %v164
    %1048 = vmatprep.subr.mxu0 0.0
    %1049 = vmatpush1.msra.mxu0 %v165
    %1050 = vmatprep.subr.mxu0 0.0
    %1051 = vmatpush1.msra.mxu0 %v166
    %1052 = vmatprep.subr.mxu0 0.0
    %1053 = vmatpush1.msra.mxu0 %v167
    %1054 = vmatprep.mubr.f32.mxu0 %v328
    %1055 = vmatmul.mubr.f32.gmra.mrb[0].mxu0 %v327
    %v1056 = vpop.f32.mrb[0].mxu0
    %v1057 = vadd.f32 %v987, %v1056
    %v1058 = vpop.f32.mrb[0].mxu0
    %1059 = vdwg.mxu0
    %vm1060 = vcmask 80896
    %1061 = vst.msk [vmem:[#allocation2] sm:$0xff] %vm1060, %v1057
    %1062 = vst [vmem:[#allocation4] sm:$0xff] %v321
    %1063 = vst [vmem:[#allocation4 + $0x8] sm:$0xff] %v322
    %1064 = vst [vmem:[#allocation4 + $0x10] sm:$0xff] %v323
    %1065 = vst [vmem:[#allocation4 + $0x18] sm:$0xff] %v324
    %1066 = vst [vmem:[#allocation4 + $0x20] sm:$0xff] %v325
    %1067 = vst [vmem:[#allocation4 + $0x28] sm:$0xff] %v326
    %1068 = vst [vmem:[#allocation4 + $0x30] sm:$0xff] %v327
    %1069 = vst [vmem:[#allocation4 + $0x38] sm:$0xff] %v328
    %vm1070 = vcmask 7168
    %1071 = vst.msk [vmem:[%s9] sm:$0xff] %vm1070, %v329
    // Predicated region
    $region37: #{tpu_custom_call.1} parent=1 // pred_check
      _
    $region38: #{tpu_custom_call.1} parent=1 // pred_check_branch
      %1073 = sbr.rel (0) target = $region40
    $region39: #{tpu_custom_call.1} parent=1 // pred_region
      %s1075 = ssub.s32 128, 128
      %1076 = vsyncadd [#allocation3], %s1075
      %s1078 = sshll.u32 [#allocation2], 4
      %s1079 = int_to_ptr.vmem [resolvable:$true] %s1078
      %1081 = dma.vmem_to_hbm [thread:$0]  %s1079, 128, %s7, [#allocation3]
    $region40: #{tpu_custom_call.1} parent=1 // pred_fallthru
      _
    // Predicated region
    $region41: #{tpu_custom_call.1} parent=1 // pred_check
      _
    $region42: #{tpu_custom_call.1} parent=1 // pred_check_branch
      %1083 = sbr.rel (0) target = $region44
    $region43: #{tpu_custom_call.1} parent=1 // pred_region
      %s1085 = ssub.s32 1024, 1024
      %1086 = vsyncadd [#allocation5], %s1085
      %s1088 = sshll.u32 [#allocation4], 4
      %s1089 = int_to_ptr.vmem [resolvable:$true] %s1088
      %1091 = dma.vmem_to_hbm [thread:$0]  %s1089, 1024, %s8, [#allocation5]
    $region44: #{tpu_custom_call.1} parent=1 // pred_fallthru
      _
    // Predicated region
    $region45: #{tpu_custom_call.1} parent=1 // pred_check
      _
    $region46: #{tpu_custom_call.1} parent=1 // pred_check_branch
      %1093 = sbr.rel (0) target = $region48
    $region47: #{tpu_custom_call.1} parent=1 // pred_region
      _
    $region48: #{tpu_custom_call.1} parent=1 // pred_fallthru
      _
    // Predicated region
    $region49: #{tpu_custom_call.1} parent=1 // pred_check
      _
    $region50: #{tpu_custom_call.1} parent=1 // pred_check_branch
      %1095 = sbr.rel (0) target = $region52
    $region51: #{tpu_custom_call.1} parent=1 // pred_region
      %1096 = dma.done [#allocation3], 128
    $region52: #{tpu_custom_call.1} parent=1 // pred_fallthru
      _
    // Predicated region
    $region53: #{tpu_custom_call.1} parent=1 // pred_check
      _
    $region54: #{tpu_custom_call.1} parent=1 // pred_check_branch
      %1098 = sbr.rel (0) target = $region56
    $region55: #{tpu_custom_call.1} parent=1 // pred_region
      %1099 = dma.done [#allocation5], 1024
    $region56: #{tpu_custom_call.1} parent=1 // pred_fallthru
      _
    // Predicated region
    $region57: #{tpu_custom_call.1} parent=1 // pred_check
      _
    $region58: #{tpu_custom_call.1} parent=1 // pred_check_branch
      %1101 = sbr.rel (0) target = $region60
    $region59: #{tpu_custom_call.1} parent=1 // pred_region
      _
    $region60: #{tpu_custom_call.1} parent=1 // pred_fallthru
      _
    %1102 = vsyncpa [#allocation3], 1
    %1103 = vsyncpa [#allocation5], 1

</llo_original>
